<compile_context>
chip_gen: v5e
topology: v5e:2x2
jax: 0.10.0
libtpu: 0.0.40
codegen_flags: <defaults>
</compile_context>

<pallas_src>
import functools

import jax
import jax.numpy as jnp
from jax.experimental import pallas as pl
from jax.experimental.pallas import tpu as pltpu


# --------------------------------------------------------------------------- #
# Pallas kernel: tiled (X @ Ct) - bias with f32 accumulation over D.
# --------------------------------------------------------------------------- #
def _pca_matmul_kernel(x_ref, ct_ref, bias_ref, out_ref, acc_ref):
    # x_ref:    (TM, TK)     VMEM  -- row/feature tile of X
    # ct_ref:   (TK, K_pad)  VMEM  -- pre-transposed, lane-padded components
    # bias_ref: (1,  K_pad)  VMEM  -- mean_ @ components_.T, lane-padded
    # out_ref:  (TM, K_pad)  VMEM  -- lane-dense output tile
    # acc_ref:  (TM, K_pad)  f32 VMEM scratch (resident across the D axis)
    k = pl.program_id(1)

    @pl.when(k == 0)
    def _():
        acc_ref[...] = jnp.zeros_like(acc_ref)

    acc_ref[...] += jnp.dot(
        x_ref[...], ct_ref[...], preferred_element_type=jnp.float32
    )

    @pl.when(k == pl.num_programs(1) - 1)
    def _():
        out_ref[...] = (acc_ref[...] - bias_ref[...]).astype(out_ref.dtype)


def _round_up(x, m):
    return ((x + m - 1) // m) * m


@functools.partial(jax.jit, static_argnames=())
def _pca_transform_pallas(x, mean_, components_):
    n, d = x.shape
    k = components_.shape[0]

    # Tile sizes: biggest tiles that comfortably fit every generation's VMEM
    # (TM=512, TK=2048 f32 => ~11 MiB working set incl. double buffering,
    #  well under the 64 MiB physical VMEM of v7x).  TODO(synk): re-sweep
    # TM/TK per chip generation and optionally stream X/Ct in bf16.
    tm = min(512, _round_up(n, 8))
    tk = min(2048, _round_up(d, 128))
    k_pad = _round_up(k, 128)          # lane-dense output (unmasked vst)
    n_pad = _round_up(n, tm)
    d_pad = _round_up(d, tk)

    x32 = x.astype(jnp.float32)
    c32 = components_.astype(jnp.float32)
    m32 = mean_.astype(jnp.float32)

    # Zero-padding is exact: padded D columns contribute 0 to the dot, padded
    # rows / K columns are sliced off below.
    xp = jnp.pad(x32, ((0, n_pad - n), (0, d_pad - d)))
    ct = jnp.pad(c32.T, ((0, d_pad - d), (0, k_pad - k)))          # (Dp, Kp)
    bias = jnp.pad(m32 @ c32.T, ((0, 0), (0, k_pad - k)))          # (1,  Kp)

    grid = (n_pad // tm, d_pad // tk)

    out = pl.pallas_call(
        _pca_matmul_kernel,
        out_shape=jax.ShapeDtypeStruct((n_pad, k_pad), jnp.float32),
        grid=grid,
        in_specs=[
            pl.BlockSpec((tm, tk), lambda i, kk: (i, kk)),      # X tile
            pl.BlockSpec((tk, k_pad), lambda i, kk: (kk, 0)),   # Ct tile
            pl.BlockSpec((1, k_pad), lambda i, kk: (0, 0)),     # bias (tiny)
        ],
        out_specs=pl.BlockSpec((tm, k_pad), lambda i, kk: (i, 0)),
        scratch_shapes=[pltpu.VMEM((tm, k_pad), jnp.float32)],
        compiler_params=pltpu.CompilerParams(
            dimension_semantics=("parallel", "arbitrary"),
            vmem_limit_bytes=48 * 1024 * 1024,
        ),
        cost_estimate=pl.CostEstimate(
            flops=2 * n_pad * d_pad * k_pad,
            transcendentals=0,
            bytes_accessed=(n_pad * d_pad + d_pad * k_pad + n_pad * k_pad) * 4,
        ),
    )(xp, ct, bias)

    return out[:n, :k]


def pca_transform(x, mean_, components_, use_pallas=None):
    """out = (x - mean_) @ components_.T  (== PCA_torch.transform / forward)."""
    n, d = x.shape
    k, d2 = components_.shape
    assert d == d2 and mean_.shape == (1, d)
    if use_pallas is None:
        # Tiny problems fit in a handful of vregs; the Pallas launch + per-step
        # overhead is not worth it -> let XLA's fused matmul handle them.
        use_pallas = (n * d * x.dtype.itemsize) >= (256 * 1024)
    if not use_pallas:
        return (x.astype(jnp.float32) - mean_) @ components_.T
    return _pca_transform_pallas(x, mean_, components_)


# ---------------- plain-JAX glue: deterministic "fit" (mean + SVD + svd_flip) ----
def svd_flip_jax(u, v):
    max_abs_cols = jnp.argmax(jnp.abs(u), axis=0)
    i = jnp.arange(u.shape[1])
    signs = jnp.sign(u[max_abs_cols, i])
    u = u * signs
    v = v * signs[:, None]
    return u, v


def pca_fit(X, n_components):
    # TODO(synk): SVD has no Pallas equivalent; fit stays in plain JAX.
    n, d = X.shape
    k = min(n_components, d) if n_components is not None else d
    mean_ = jnp.mean(X, axis=0, keepdims=True)               # (1, D)
    Z = X - mean_
    U, S, Vh = jnp.linalg.svd(Z, full_matrices=False)
    U, Vt = svd_flip_jax(U, Vh)
    components_ = Vt[:k]                                     # (K, D)
    return mean_, components_


if __name__ == "__main__":
    key = jax.random.PRNGKey(0)
    k1, k2, k3, k4, k5 = jax.random.split(key, 5)

    # --- small case (matches the PyTorch module's typical toy use) -----------
    N, D, K = 16, 32, 8
    X_fit = jax.random.normal(k1, (N, D), dtype=jnp.float32)
    X = jax.random.normal(k2, (N, D), dtype=jnp.float32)
    mean_, components_ = pca_fit(X_fit, n_components=K)

    out = pca_transform(X, mean_, components_, use_pallas=True)  # exercise kernel
    out = jax.block_until_ready(out)
    ref = (X - mean_) @ components_.T
    assert out.shape == (N, K)
    assert jnp.allclose(out, ref, atol=2e-5, rtol=1e-4), "small-case mismatch"

    # --- larger case: exercises the (rows x D) grid, accumulator & pipelining -
    N2, D2, K2 = 1024, 4096, 8
    X2 = jax.random.normal(k3, (N2, D2), dtype=jnp.float32)
    mean2 = jax.random.normal(k4, (1, D2), dtype=jnp.float32) * 0.1
    comps2 = jax.random.normal(k5, (K2, D2), dtype=jnp.float32) / jnp.sqrt(D2)

    out2 = pca_transform(X2, mean2, comps2)                   # auto -> Pallas
    out2 = jax.block_until_ready(out2)
    ref2 = (X2 - mean2) @ comps2.T
    assert out2.shape == (N2, K2)
    assert jnp.allclose(out2, ref2, atol=2e-3, rtol=1e-3), "large-case mismatch"

    print("KERNEL_OK")
</pallas_src>

<mosaic_0001>
module attributes {stable_mosaic.version = 11 : i64} {
  func.func @_pca_matmul_kernel(%arg0: i32, %arg1: i32, %arg2: memref<16x128xf32, #tpu.memory_space<vmem>>, %arg3: memref<128x128xf32, #tpu.memory_space<vmem>>, %arg4: memref<1x128xf32, #tpu.memory_space<vmem>>, %arg5: memref<16x128xf32, #tpu.memory_space<vmem>>, %arg6: memref<16x128xf32, #tpu.memory_space<vmem>>) attributes {dimension_semantics = [#tpu.dimension_semantics<parallel>, #tpu.dimension_semantics<arbitrary>], iteration_bounds = array<i64: 1, 1>, scalar_prefetch = 0 : i64, scratch_operands = 1 : i64, tpu.core_type = #tpu.core_type<tc>, window_params = [{transform_indices = @transform_0, window_bounds = array<i64: 16, 128>}, {transform_indices = @transform_1, window_bounds = array<i64: 128, 128>}, {pipeline_mode = #tpu.pipeline_mode<synchronous>, transform_indices = @transform_2, window_bounds = array<i64: 1, 128>}, {transform_indices = @transform_3, window_bounds = array<i64: 16, 128>}]} {
    %c0_i32 = arith.constant 0 : i32
    %0 = arith.cmpi eq, %arg1, %c0_i32 : i32
    %1 = arith.extui %0 : i1 to i32
    %c0_i32_0 = arith.constant 0 : i32
    %2 = arith.cmpi ne, %1, %c0_i32_0 : i32
    scf.if %2 {
      %cst_10 = arith.constant 0.000000e+00 : f32
      %12 = vector.broadcast %cst_10 : f32 to vector<16x128xf32>
      %c0_11 = arith.constant 0 : index
      %c0_12 = arith.constant 0 : index
      %13 = vector.load %arg6[%c0_11, %c0_12] : memref<16x128xf32, #tpu.memory_space<vmem>>, vector<16x128xf32>
      tpu.vector_store %arg6[%c0_11, %c0_12], %12 {strides = array<i32>} : memref<16x128xf32, #tpu.memory_space<vmem>>, vector<16x128xf32>,
    } else {
    }
    %c0 = arith.constant 0 : index
    %c0_1 = arith.constant 0 : index
    %3 = vector.load %arg6[%c0, %c0_1] : memref<16x128xf32, #tpu.memory_space<vmem>>, vector<16x128xf32>
    %c0_2 = arith.constant 0 : index
    %c0_3 = arith.constant 0 : index
    %4 = vector.load %arg2[%c0_2, %c0_3] : memref<16x128xf32, #tpu.memory_space<vmem>>, vector<16x128xf32>
    %c0_4 = arith.constant 0 : index
    %c0_5 = arith.constant 0 : index
    %5 = vector.load %arg3[%c0_4, %c0_5] : memref<128x128xf32, #tpu.memory_space<vmem>>, vector<128x128xf32>
    %cst = arith.constant dense<0.000000e+00> : vector<16x128xf32>
    %6 = tpu.matmul %4, %5, %cst {dimension_numbers = #tpu.dot_dimension_numbers<[1], [0], [0], [1], [0, 0, 1, 1], [], []>} : vector<16x128xf32>, vector<128x128xf32>, vector<16x128xf32> -> vector<16x128xf32>
    %7 = arith.addf %3, %6 : vector<16x128xf32>
    %c0_6 = arith.constant 0 : index
    %c0_7 = arith.constant 0 : index
    %8 = vector.load %arg6[%c0_6, %c0_7] : memref<16x128xf32, #tpu.memory_space<vmem>>, vector<16x128xf32>
    tpu.vector_store %arg6[%c0_6, %c0_7], %7 {strides = array<i32>} : memref<16x128xf32, #tpu.memory_space<vmem>>, vector<16x128xf32>,
    %c0_i32_8 = arith.constant 0 : i32
    %9 = arith.cmpi eq, %arg1, %c0_i32_8 : i32
    %10 = arith.extui %9 : i1 to i32
    %c0_i32_9 = arith.constant 0 : i32
    %11 = arith.cmpi ne, %10, %c0_i32_9 : i32
    scf.if %11 {
      %c0_10 = arith.constant 0 : index
      %c0_11 = arith.constant 0 : index
      %12 = vector.load %arg6[%c0_10, %c0_11] : memref<16x128xf32, #tpu.memory_space<vmem>>, vector<16x128xf32>
      %c0_12 = arith.constant 0 : index
      %c0_13 = arith.constant 0 : index
      %13 = vector.load %arg4[%c0_12, %c0_13] : memref<1x128xf32, #tpu.memory_space<vmem>>, vector<1x128xf32>
      %14 = vector.broadcast %13 : vector<1x128xf32> to vector<16x128xf32>
      %15 = arith.subf %12, %14 : vector<16x128xf32>
      %c0_14 = arith.constant 0 : index
      %c0_15 = arith.constant 0 : index
      %16 = vector.load %arg5[%c0_14, %c0_15] : memref<16x128xf32, #tpu.memory_space<vmem>>, vector<16x128xf32>
      tpu.vector_store %arg5[%c0_14, %c0_15], %15 {strides = array<i32>} : memref<16x128xf32, #tpu.memory_space<vmem>>, vector<16x128xf32>,
    } else {
    }
    return
  }
  func.func @transform_0(%arg0: i32, %arg1: i32) -> (i32, i32) {
    %c0_i32 = arith.constant 0 : i32
    return %arg0, %arg1 : i32, i32
  }
  func.func @transform_1(%arg0: i32, %arg1: i32) -> (i32, i32) {
    %c0_i32 = arith.constant 0 : i32
    %c0_i32_0 = arith.constant 0 : i32
    return %arg1, %c0_i32 : i32, i32
  }
  func.func @transform_2(%arg0: i32, %arg1: i32) -> (i32, i32) {
    %c0_i32 = arith.constant 0 : i32
    %c0_i32_0 = arith.constant 0 : i32
    %c0_i32_1 = arith.constant 0 : i32
    return %c0_i32, %c0_i32_0 : i32, i32
  }
  func.func @transform_3(%arg0: i32, %arg1: i32) -> (i32, i32) {
    %c0_i32 = arith.constant 0 : i32
    %c0_i32_0 = arith.constant 0 : i32
    return %arg0, %c0_i32 : i32, i32
  }
}

</mosaic_0001>

<llo_original>
// kernel: _pca_transform_pallas.1
$region0: #{_pca_transform_pallas.1}
  #allocation0 [shape = 'u32[]', space=smem, size = 0x4, offset = 0x4, fixed_abs, tag = 'smem constant byte address 0x4 - core index']
  #allocation1 [shape = 'u32[72,128]{1,0:T(1,128)}', space=vmem, size = 0x9000, scoped, tag = 'internal scratch']
  #allocation2 [shape = 'f32[16,128]{1,0:T(8,128)}', space=vmem, size = 0x2000, scoped, tag = 'scratch operand']
  %s0 = inlined_call_operand.vmem [shape: f32[16,128], index: 0, kind: input, shape index: {}]
  %s1 = inlined_call_operand.vmem [shape: f32[128,128], index: 1, kind: input, shape index: {}]
  %s2 = inlined_call_operand.vmem [shape: f32[1,128], index: 2, kind: input, shape index: {}]
  %s3 = inlined_call_operand.vmem [shape: f32[16,128], index: 3, kind: output, shape index: {}]
  %s4 = sld [smem:[#allocation0]]
  $region30: #{_pca_transform_pallas.1} parent=0
    _
  %s6 = ssub.s32 1, %s4
  %s7 = scalar_select 0, %s6, %s4
  // Predicated region
  $region2: #{_pca_transform_pallas.1} parent=0 // pred_check
    _
  $region3: #{_pca_transform_pallas.1} parent=0 // pred_check_branch
    %9 = sbr.rel (0) target = $region5
  $region4: #{_pca_transform_pallas.1} parent=0 // pred_region
    _
  $region5: #{_pca_transform_pallas.1} parent=0 // pred_fallthru
    _
  // Predicated region
  $region6: #{_pca_transform_pallas.1} parent=0 // pred_check
    _
  $region7: #{_pca_transform_pallas.1} parent=0 // pred_check_branch
    %11 = sbr.rel (0) target = $region9
  $region8: #{_pca_transform_pallas.1} parent=0 // pred_region
    _
  $region9: #{_pca_transform_pallas.1} parent=0 // pred_fallthru
    _
  // Predicated region
  $region10: #{_pca_transform_pallas.1} parent=0 // pred_check
    _
  $region11: #{_pca_transform_pallas.1} parent=0 // pred_check_branch
    %13 = sbr.rel (0) target = $region13
  $region12: #{_pca_transform_pallas.1} parent=0 // pred_region
    _
  $region13: #{_pca_transform_pallas.1} parent=0 // pred_fallthru
    _
  %p14 = scmp.eq.s32.totalorder 0, 0
  // Predicated region
  $region14: #{_pca_transform_pallas.1} parent=0 // pred_check
    %p15 = pneg %p14
  $region15: #{_pca_transform_pallas.1} parent=0 // pred_check_branch
    %17 = sbr.rel (%p15) target = $region17
  $region16: #{_pca_transform_pallas.1} parent=0 // pred_region
    %18 = vst [vmem:[#allocation2] sm:$0xff] 0.0
    %19 = vst [vmem:[#allocation2 + $0x8] sm:$0xff] 0.0
  $region17: #{_pca_transform_pallas.1} parent=0 // pred_fallthru
    _
  %v20 = vld [vmem:[#allocation2] sm:$0xff]
  %v21 = vld [vmem:[#allocation2 + $0x8] sm:$0xff]
  %v22 = vld [vmem:[%s0] sm:$0xff]
  %v23 = vld [vmem:[%s0 + $0x8] sm:$0xff]
  %v24 = vld [vmem:[%s1] sm:$0xff]
  %v25 = vld [vmem:[%s1 + $0x8] sm:$0xff]
  %v26 = vld [vmem:[%s1 + $0x10] sm:$0xff]
  %v27 = vld [vmem:[%s1 + $0x18] sm:$0xff]
  %v28 = vld [vmem:[%s1 + $0x20] sm:$0xff]
  %v29 = vld [vmem:[%s1 + $0x28] sm:$0xff]
  %v30 = vld [vmem:[%s1 + $0x30] sm:$0xff]
  %v31 = vld [vmem:[%s1 + $0x38] sm:$0xff]
  %v32 = vld [vmem:[%s1 + $0x40] sm:$0xff]
  %v33 = vld [vmem:[%s1 + $0x48] sm:$0xff]
  %v34 = vld [vmem:[%s1 + $0x50] sm:$0xff]
  %v35 = vld [vmem:[%s1 + $0x58] sm:$0xff]
  %v36 = vld [vmem:[%s1 + $0x60] sm:$0xff]
  %v37 = vld [vmem:[%s1 + $0x68] sm:$0xff]
  %v38 = vld [vmem:[%s1 + $0x70] sm:$0xff]
  %v39 = vld [vmem:[%s1 + $0x78] sm:$0xff]
  %40 = vmatpush.msra.mxu0 %v39
  %41 = vmatpush.msra.mxu0 %v38
  %42 = vmatpush.msra.mxu0 %v37
  %43 = vmatpush.msra.mxu0 %v36
  %44 = vmatpush.msra.mxu0 %v35
  %45 = vmatpush.msra.mxu0 %v34
  %46 = vmatpush.msra.mxu0 %v33
  %47 = vmatpush.msra.mxu0 %v32
  %48 = vmatpush.msra.mxu0 %v31
  %49 = vmatpush.msra.mxu0 %v30
  %50 = vmatpush.msra.mxu0 %v29
  %51 = vmatpush.msra.mxu0 %v28
  %52 = vmatpush.msra.mxu0 %v27
  %53 = vmatpush.msra.mxu0 %v26
  %54 = vmatpush.msra.mxu0 %v25
  %55 = vmatpush.msra.mxu0 %v24
  %56 = vmatmul.f32.gmra.mxu0 %v22
  %v57 = vpop.f32.mrf.mxu0
  %v58 = vadd.f32 0.0, %v57
  %59 = vmatmul.f32.gmra.mxu0 %v23
  %v60 = vpop.f32.mrf.mxu0
  %v61 = vadd.f32 0.0, %v60
  %62 = vdwg.mxu0
  %v63 = vadd.f32 %v20, %v58
  %v64 = vadd.f32 %v21, %v61
  %65 = vst [vmem:[#allocation2] sm:$0xff] %v63
  %66 = vst [vmem:[#allocation2 + $0x8] sm:$0xff] %v64
  // Predicated region
  $region18: #{_pca_transform_pallas.1} parent=0 // pred_check
    %p67 = pneg %p14
  $region19: #{_pca_transform_pallas.1} parent=0 // pred_check_branch
    %69 = sbr.rel (%p67) target = $region21
  $region20: #{_pca_transform_pallas.1} parent=0 // pred_region
    %v70 = vld [vmem:[#allocation2] sm:$0xff]
    %v71 = vld [vmem:[#allocation2 + $0x8] sm:$0xff]
    %v72 = vld [vmem:[%s2] sm:$0x1]
    %v74 = vperm.slane %v72, 0
    %v76 = vsub.f32 %v70, %v74
    %v77 = vsub.f32 %v71, %v74
    %78 = vst [vmem:[%s3] sm:$0xff] %v76
    %79 = vst [vmem:[%s3 + $0x8] sm:$0xff] %v77
  $region21: #{_pca_transform_pallas.1} parent=0 // pred_fallthru
    _
  // Predicated region
  $region22: #{_pca_transform_pallas.1} parent=0 // pred_check
    _
  $region23: #{_pca_transform_pallas.1} parent=0 // pred_check_branch
    %81 = sbr.rel (0) target = $region25
  $region24: #{_pca_transform_pallas.1} parent=0 // pred_region
    _
  $region25: #{_pca_transform_pallas.1} parent=0 // pred_fallthru
    _
  // Predicated region
  $region26: #{_pca_transform_pallas.1} parent=0 // pred_check
    _
  $region27: #{_pca_transform_pallas.1} parent=0 // pred_check_branch
    %83 = sbr.rel (0) target = $region29
  $region28: #{_pca_transform_pallas.1} parent=0 // pred_region
    _
  $region29: #{_pca_transform_pallas.1} parent=0 // pred_fallthru
    _

</llo_original>
